<compile_context>
chip_gen: v7x
topology: tpu7x:2x2x1
jax: 0.10.0
libtpu: 0.0.40
codegen_flags: <defaults>
</compile_context>

<pallas_src>
import jax
import jax.numpy as jnp
from jax.experimental import pallas as pl
from jax.experimental.pallas import tpu as pltpu

_TILE_ELEMS = 512 * 1024          # ~2 MiB per f32 tile
_LANE_CHOICES = (1024, 512, 256, 128)


def _mish_kernel(x_ref, o_ref):
    x = x_ref[...].astype(jnp.float32)
    # tanh(softplus(x)) = ((1+e^x)^2 - 1) / ((1+e^x)^2 + 1), rewritten with
    # t = exp(-|x|) in (0, 1] (never overflows):
    #   x >= 0: tanh = 1 - 2*t^2 / ((1+t)^2 + t^2)
    #   x <  0: tanh = 1 - 2*1   / ((1+t)^2 + 1)
    # -> single select, one exp, one divide.
    t = jnp.exp(-jnp.abs(x))
    s = 1.0 + t
    a = jnp.where(x >= 0.0, t * t, 1.0)
    den = s * s + a                       # >= 1, no divide-by-zero
    o_ref[...] = (x - 2.0 * x * (a / den)).astype(o_ref.dtype)


def _round_up(v: int, m: int) -> int:
    return ((v + m - 1) // m) * m


def mish(x: jax.Array) -> jax.Array:
    """Elementwise mish(x) = x * tanh(softplus(x)); any shape, any float dtype."""
    orig_shape = x.shape
    orig_dtype = x.dtype
    n = x.size
    if n == 0:
        return x

    flat = x.reshape(-1)                  # contiguous reshape: free, no copy

    # Widest lane slab in {1024,...,128} that divides n -> zero-copy path.
    lanes = next((l for l in _LANE_CHOICES if n % l == 0), None)
    if lanes is None:
        # Truly ragged (no 128 divisor): minimal pad to one vreg width.
        # Rare; costs one extra pad + slice pass.
        lanes = 128
        n_proc = _round_up(n, lanes)
        flat = jnp.pad(flat, (0, n_proc - n))
    else:
        n_proc = n

    rows = n_proc // lanes
    x2d = flat.reshape(rows, lanes)

    if rows <= 8:
        blk_rows = rows                   # single block == full array dims
    else:
        target = max(8, _TILE_ELEMS // lanes)          # ~2 MiB tile
        half = _round_up(pl.cdiv(rows, 2), 8)          # >= 2 steps: v7x dual-TC
        blk_rows = min(target, half)                   # multiple of 8
    grid = (pl.cdiv(rows, blk_rows),)

    itemsize = jnp.dtype(orig_dtype).itemsize
    cost = pl.CostEstimate(
        flops=12 * n_proc,                # abs/add/select/polys/final mul-sub
        transcendentals=2 * n_proc,       # exp + divide
        bytes_accessed=2 * n_proc * itemsize,  # one read + one write pass
    )

    out2d = pl.pallas_call(
        _mish_kernel,
        out_shape=jax.ShapeDtypeStruct((rows, lanes), orig_dtype),
        grid_spec=pltpu.PrefetchScalarGridSpec(
            num_scalar_prefetch=0,
            grid=grid,
            in_specs=[pl.BlockSpec((blk_rows, lanes), lambda i: (i, 0))],
            out_specs=pl.BlockSpec((blk_rows, lanes), lambda i: (i, 0)),
        ),
        compiler_params=pltpu.CompilerParams(
            dimension_semantics=("parallel",),
        ),
        cost_estimate=cost,
    )(x2d)

    if n_proc != n:
        return out2d.reshape(-1)[:n].reshape(orig_shape)
    return out2d.reshape(orig_shape)


def _mish_ref(x):
    xf = x.astype(jnp.float32)
    sp = jnp.maximum(xf, 0.0) + jnp.log1p(jnp.exp(-jnp.abs(xf)))
    return (xf * jnp.tanh(sp)).astype(x.dtype)


if __name__ == "__main__":
    key = jax.random.PRNGKey(0)

    # Small NCHW input, consistent with typical conv-net usage of Mish.
    # n = 2048 -> lanes=1024, rows=2, single full block, zero-copy wrapper.
    x = jax.random.normal(key, (2, 4, 16, 16), dtype=jnp.float32)
    y = mish(x)
    jax.block_until_ready(y)
    assert y.shape == x.shape and y.dtype == x.dtype
    assert jnp.allclose(y, _mish_ref(x), atol=1e-5, rtol=1e-5), "mismatch (main)"

    # Multi-block path (rows > 8 -> grid of >= 2 parallel steps), wider range.
    x2 = jax.random.normal(jax.random.PRNGKey(1), (64, 1024), dtype=jnp.float32) * 6.0
    y2 = mish(x2)
    jax.block_until_ready(y2)
    assert y2.shape == x2.shape and y2.dtype == x2.dtype
    assert jnp.allclose(y2, _mish_ref(x2), atol=1e-5, rtol=1e-5), "mismatch (multi-block)"

    # Truly ragged size (105 elements) exercising the minimal-pad fallback and
    # the large-|x| stability of the algebraic rewrite.
    x3 = jax.random.normal(jax.random.PRNGKey(2), (3, 5, 7), dtype=jnp.float32) * 8.0
    y3 = mish(x3)
    jax.block_until_ready(y3)
    assert y3.shape == x3.shape and y3.dtype == x3.dtype
    assert jnp.allclose(y3, _mish_ref(x3), atol=1e-5, rtol=1e-5), "mismatch (ragged)"

    print("KERNEL_OK")
</pallas_src>

<mosaic_0001>
module attributes {stable_mosaic.version = 11 : i64} {
  func.func @_mish_kernel(%arg0: i32, %arg1: memref<2x1024xf32, #tpu.memory_space<vmem>>, %arg2: memref<2x1024xf32, #tpu.memory_space<vmem>>) attributes {dimension_semantics = [#tpu.dimension_semantics<parallel>], iteration_bounds = array<i64: 1>, scalar_prefetch = 0 : i64, scratch_operands = 0 : i64, tpu.core_type = #tpu.core_type<tc>, window_params = [{transform_indices = @transform_0, window_bounds = array<i64: 2, 1024>}, {transform_indices = @transform_1, window_bounds = array<i64: 2, 1024>}]} {
    %c0 = arith.constant 0 : index
    %c0_0 = arith.constant 0 : index
    %0 = vector.load %arg1[%c0, %c0_0] : memref<2x1024xf32, #tpu.memory_space<vmem>>, vector<2x1024xf32>
    %1 = math.absf %0 : vector<2x1024xf32>
    %cst = arith.constant 0.000000e+00 : f32
    %2 = vector.broadcast %cst : f32 to vector<2x1024xf32>
    %3 = arith.subf %2, %1 : vector<2x1024xf32>
    %4 = math.exp %3 : vector<2x1024xf32>
    %cst_1 = arith.constant 1.000000e+00 : f32
    %5 = vector.broadcast %cst_1 : f32 to vector<2x1024xf32>
    %6 = arith.addf %5, %4 : vector<2x1024xf32>
    %cst_2 = arith.constant 0.000000e+00 : f32
    %7 = vector.broadcast %cst_2 : f32 to vector<2x1024xf32>
    %8 = arith.cmpf oge, %0, %7 : vector<2x1024xf32>
    %9 = arith.mulf %4, %4 : vector<2x1024xf32>
    %cst_3 = arith.constant 1.000000e+00 : f32
    %10 = vector.broadcast %cst_3 : f32 to vector<2x1024xf32>
    %11 = arith.select %8, %9, %10 : vector<2x1024xi1>, vector<2x1024xf32>
    %12 = arith.mulf %6, %6 : vector<2x1024xf32>
    %13 = arith.addf %12, %11 : vector<2x1024xf32>
    %cst_4 = arith.constant 2.000000e+00 : f32
    %14 = vector.broadcast %cst_4 : f32 to vector<2x1024xf32>
    %15 = arith.mulf %14, %0 : vector<2x1024xf32>
    %16 = arith.divf %11, %13 : vector<2x1024xf32>
    %17 = arith.mulf %15, %16 : vector<2x1024xf32>
    %18 = arith.subf %0, %17 : vector<2x1024xf32>
    %c0_5 = arith.constant 0 : index
    %c0_6 = arith.constant 0 : index
    %19 = vector.load %arg2[%c0_5, %c0_6] : memref<2x1024xf32, #tpu.memory_space<vmem>>, vector<2x1024xf32>
    tpu.vector_store %arg2[%c0_5, %c0_6], %18 {strides = array<i32>} : memref<2x1024xf32, #tpu.memory_space<vmem>>, vector<2x1024xf32>,
    return
  }
  func.func @transform_0(%arg0: i32) -> (i32, i32) {
    %c0_i32 = arith.constant 0 : i32
    %c0_i32_0 = arith.constant 0 : i32
    return %arg0, %c0_i32 : i32, i32
  }
  func.func @transform_1(%arg0: i32) -> (i32, i32) {
    %c0_i32 = arith.constant 0 : i32
    %c0_i32_0 = arith.constant 0 : i32
    return %arg0, %c0_i32 : i32, i32
  }
}

</mosaic_0001>

<llo_original>
// kernel: tpu_custom_call.1
$region0: #{tpu_custom_call.1}
  #allocation0 [shape = 'u32[]', space=smem, size = 0x4, offset = 0x4, fixed_abs, tag = 'smem constant byte address 0x4 - core index']
  #allocation1 [shape = 'u32[144,128]{1,0:T(1,128)}', space=vmem, size = 0x12000, scoped, tag = 'internal scratch']
  %s0 = inlined_call_operand.hbm [shape: f32[2,1024], index: 0, kind: input, shape index: {}]
  %s1 = inlined_call_operand.hbm [shape: f32[2,1024], index: 1, kind: output, shape index: {}]
  %s2 = sld [smem:[#allocation0]]
  $region18: #{tpu_custom_call.1} parent=0
    _
  %s4 = ssub.s32 1, %s2
  %s5 = scalar_select 0, %s4, %s2
  $region1: #{tpu_custom_call.1} parent=0
    #allocation2 [shape = 'u8[8192]{0}', space=vmem, size = 0x2000, scoped, tag = 'input window, operand 0, single buffered']
    #allocation3 [shape = 's32[1]{0}', space=sflag, size = 0x4, scoped, tag = 'scoped memory for tpu_custom_call.1']
    #allocation4 [shape = 's32[1]{0}', space=sflag, size = 0x4, scoped, tag = 'scoped memory for tpu_custom_call.1']
    #allocation5 [shape = 'u8[8192]{0}', space=vmem, size = 0x2000, scoped, tag = 'output window, operand 0, single buffered']
    %6 = vsyncpa [#allocation3], 0
    %7 = vsyncpa [#allocation4], 0
    // Predicated region
    $region2: #{tpu_custom_call.1} parent=1 // pred_check
      _
    $region3: #{tpu_custom_call.1} parent=1 // pred_check_branch
      %9 = sbr.rel (0) target = $region5
    $region4: #{tpu_custom_call.1} parent=1 // pred_region
      %s11 = ssub.s32 256, 256
      %12 = vsyncadd [#allocation3], %s11
      %s14 = sshll.u32 [#allocation2], 4
      %s15 = int_to_ptr.vmem [resolvable:$true] %s14
      %17 = dma.hbm_to_vmem [thread:$0]  %s0, 256, %s15, [#allocation3]
    $region5: #{tpu_custom_call.1} parent=1 // pred_fallthru
      _
    // Predicated region
    $region6: #{tpu_custom_call.1} parent=1 // pred_check
      _
    $region7: #{tpu_custom_call.1} parent=1 // pred_check_branch
      %19 = sbr.rel (0) target = $region9
    $region8: #{tpu_custom_call.1} parent=1 // pred_region
      %20 = dma.done [#allocation3], 256
    $region9: #{tpu_custom_call.1} parent=1 // pred_fallthru
      _
    %v21 = vld [vmem:[#allocation2] sm:$0xff]
    %v22 = vld [vmem:[#allocation2 + $0x8] sm:$0xff]
    %v23 = vand.u32 2147483647, %v21
    %v24 = vand.u32 2147483647, %v22
    %v25 = vsub.f32 0.0, %v23
    %v26 = vsub.f32 0.0, %v24
    %v27 = vmul.f32 %v25, 1.442695
    %v28 = vpow.pop %v27
    %v29 = vmul.f32 %v26, 1.442695
    %v30 = vpow.pop %v29
    %v31 = vadd.f32 %v28, 1.0
    %v32 = vadd.f32 %v30, 1.0
    %vm33 = vcmp.ge.f32.partialorder %v21, 0.0
    %vm34 = vcmp.ge.f32.partialorder %v22, 0.0
    %v35 = vmul.f32 %v28, %v28
    %v36 = vmul.f32 %v30, %v30
    %v37 = vsel %vm33, %v35, 1.0
    %v38 = vsel %vm34, %v36, 1.0
    %v39 = vmul.f32 %v31, %v31
    %v40 = vmul.f32 %v32, %v32
    %v41 = vadd.f32 %v39, %v37
    %v42 = vadd.f32 %v40, %v38
    %v43 = vmul.f32 %v21, 2.0
    %v44 = vmul.f32 %v22, 2.0
    %v45 = vrcp.pop %v41
    %v46 = vmul.f32 %v37, %v45
    %v47 = vrcp.pop %v42
    %v48 = vmul.f32 %v38, %v47
    %v49 = vmul.f32 %v43, %v46
    %v50 = vmul.f32 %v44, %v48
    %v51 = vsub.f32 %v21, %v49
    %v52 = vsub.f32 %v22, %v50
    %53 = vst [vmem:[#allocation5] sm:$0xff] %v51
    %54 = vst [vmem:[#allocation5 + $0x8] sm:$0xff] %v52
    // Predicated region
    $region10: #{tpu_custom_call.1} parent=1 // pred_check
      _
    $region11: #{tpu_custom_call.1} parent=1 // pred_check_branch
      %56 = sbr.rel (0) target = $region13
    $region12: #{tpu_custom_call.1} parent=1 // pred_region
      %s58 = ssub.s32 256, 256
      %59 = vsyncadd [#allocation4], %s58
      %s61 = sshll.u32 [#allocation5], 4
      %s62 = int_to_ptr.vmem [resolvable:$true] %s61
      %64 = dma.vmem_to_hbm [thread:$0]  %s62, 256, %s1, [#allocation4]
    $region13: #{tpu_custom_call.1} parent=1 // pred_fallthru
      _
    // Predicated region
    $region14: #{tpu_custom_call.1} parent=1 // pred_check
      _
    $region15: #{tpu_custom_call.1} parent=1 // pred_check_branch
      %66 = sbr.rel (0) target = $region17
    $region16: #{tpu_custom_call.1} parent=1 // pred_region
      %67 = dma.done [#allocation4], 256
    $region17: #{tpu_custom_call.1} parent=1 // pred_fallthru
      _
    %68 = vsyncpa [#allocation3], 1
    %69 = vsyncpa [#allocation4], 1

</llo_original>
